<compile_context>
chip_gen: v7x
topology: tpu7x:2x2x1
jax: 0.10.0
libtpu: 0.0.40
codegen_flags: <defaults>
</compile_context>

<pallas_src>
import functools

import jax
import jax.numpy as jnp
from jax.experimental import pallas as pl
from jax.experimental.pallas import tpu as pltpu

_EPS = 1e-5                  # torch.nn.InstanceNorm2d default eps (affine=False)
_MXU_DTYPE = jnp.float32     # set jnp.bfloat16 for native-MXU speed if tolerance allows


# ----------------------------- Pallas kernel --------------------------------

def _fused_residual_block_kernel(x_ref, w1_ref, w2_ref, m_ref, o_ref, *, wp):
    """Fused ReflectPad -> Conv3x3 -> IN -> ReLU -> ReflectPad -> Conv3x3 -> IN -> +x.

    One batch element per grid step.  Spatial positions of the padded image are
    flattened onto the lane axis: p = r * wp + c, zero-padded up to a multiple of
    128 lanes.

    x_ref : (Cp, L)       zero-border, lane-padded input (reflect border rebuilt here)
    w1_ref: (Cp, 9*Cp)    conv1 weight, tap-folded: w[o, t*Cp + i] = W[o, i, di, dj]
    w2_ref: (Cp, 9*Cp)    conv2 weight, same layout
    m_ref : (6, L)        f32 masks: [interior/(H*W), interior, row0, rowLast, col0, colLast]
    o_ref : (C, L)        output; only interior lanes are meaningful
    """
    x = x_ref[...]
    lanes = x.shape[-1]

    m_mu = m_ref[0:1, :]     # interior mask pre-scaled by 1/(H*W)
    m_int = m_ref[1:2, :]    # interior mask {0,1}
    m_r0 = m_ref[2:3, :]
    m_rl = m_ref[3:4, :]
    m_c0 = m_ref[4:5, :]
    m_cl = m_ref[5:6, :]

    shifts = tuple((di - 1) * wp + (dj - 1) for di in range(3) for dj in range(3))

    def shift_lanes(v, s):
        # y[:, p] = v[:, p + s]  (cyclic; the wrap never reaches lanes we use)
        if s == 0:
            return v
        return pltpu.roll(v, (-s) % lanes, axis=1)

    def reflect_pad(v):
        # Rebuild ReflectionPad2d(1) in the flat layout; border lanes of `v` must
        # already be zero.  Rows first (row0 <- row2, rowLast <- rowLast-2), then
        # columns (col0 <- col2, colLast <- colLast-2); corners fall out correctly.
        v = v + m_r0 * shift_lanes(v, 2 * wp) + m_rl * shift_lanes(v, -2 * wp)
        v = v + m_c0 * shift_lanes(v, 2) + m_cl * shift_lanes(v, -2)
        return v

    def conv3x3(v, w_ref):
        # Single MXU contraction: stack the 9 lane-shifted views on the sublane
        # (channel) axis -> (9*Cp, L), contract with the (Cp, 9*Cp) folded weight.
        vb = v.astype(w_ref.dtype)
        op = jnp.concatenate([shift_lanes(vb, s) for s in shifts], axis=0)
        return jnp.dot(w_ref[...], op, preferred_element_type=jnp.float32)

    def instance_norm(y):
        # Moments over the true interior only; 1/(H*W) folded into the mask and
        # `ym` reused for both reductions.  rsqrt goes to the EUP.
        ym = y * m_mu
        mean = jnp.sum(ym, axis=-1, keepdims=True)
        var = jnp.sum(ym * y, axis=-1, keepdims=True) - mean * mean
        return (y - mean) * jax.lax.rsqrt(var + _EPS)

    # ---- stage 1: reflect-pad -> conv -> IN -> ReLU (valid on interior lanes) ----
    h = jnp.maximum(instance_norm(conv3x3(reflect_pad(x), w1_ref)), 0.0)

    # ---- stage 2: zero border ring, reflect-pad, conv -> IN -> residual add ------
    y = instance_norm(conv3x3(reflect_pad(h * m_int), w2_ref))

    co = o_ref.shape[0]          # only the real C channels are written back
    o_ref[...] = x[:co, :] + y[:co, :]


# ------------------------------ JAX wrapper ----------------------------------

def _make_masks(H, W, L):
    Hp, Wp = H + 2, W + 2
    idx = jnp.arange(L)
    r = idx // Wp
    c = idx % Wp
    valid = idx < Hp * Wp
    interior = (valid & (r >= 1) & (r <= H) & (c >= 1) & (c <= W)).astype(jnp.float32)
    row0 = (valid & (r == 0)).astype(jnp.float32)
    rowl = (valid & (r == Hp - 1)).astype(jnp.float32)
    col0 = (valid & (c == 0)).astype(jnp.float32)
    coll = (valid & (c == Wp - 1)).astype(jnp.float32)
    return jnp.stack([interior / float(H * W), interior, row0, rowl, col0, coll])


def _vmem_limit_bytes(Cp, C, L):
    # Double-buffered I/O blocks + in-kernel temporaries (stacked conv operand,
    # padded/centered tensors), with headroom; capped below v7x physical VMEM.
    blocks = (Cp * L + C * L + 2 * 9 * Cp * Cp + 6 * L) * 4
    temps = (9 * Cp * L + 8 * Cp * L) * 4
    need = 2 * blocks + temps
    return int(min(64 * 2 ** 20, max(32 * 2 ** 20, 2 * need)))


@jax.jit
def residual_block(x, w1, b1, w2, b2):
    """x: (N, C, H, W) f32; weights: (C, C, 3, 3); biases: (C,) (cancelled by IN)."""
    N, C, H, W = x.shape
    Hp, Wp = H + 2, W + 2
    Lp = Hp * Wp
    L = ((Lp + 127) // 128) * 128          # lane-dense flattened length
    Cp = max(8, ((C + 7) // 8) * 8)        # sublane-aligned channel count

    # Zero-pad the border (reflect border is rebuilt in-kernel), flatten spatial
    # onto the lane axis, pad lanes/channels.  Fuses into one XLA pass.
    xz = jnp.pad(x, ((0, 0), (0, 0), (1, 1), (1, 1)))
    xz = xz.reshape(N, C, Lp)
    xz = jnp.pad(xz, ((0, 0), (0, Cp - C), (0, L - Lp)))

    # Weights (Co, Ci, 3, 3) -> tap-folded (Cp, 9*Cp): w[o, t*Cp+i] = W[o, i, di, dj].
    def prep_w(w):
        wt = jnp.transpose(w, (0, 2, 3, 1))                         # (Co, 3, 3, Ci)
        wt = jnp.pad(wt, ((0, Cp - C), (0, 0), (0, 0), (0, Cp - C)))
        return wt.reshape(Cp, 9 * Cp).astype(_MXU_DTYPE)

    w1p, w2p = prep_w(w1), prep_w(w2)
    # b1, b2 intentionally unused: InstanceNorm2d(affine=False) subtracts the
    # per-channel mean, so per-channel conv biases cancel exactly.
    del b1, b2

    masks = _make_masks(H, W, L)

    kernel = functools.partial(_fused_residual_block_kernel, wp=Wp)
    out_flat = pl.pallas_call(
        kernel,
        out_shape=jax.ShapeDtypeStruct((N, C, L), jnp.float32),
        grid=(N,),
        in_specs=[
            pl.BlockSpec((None, Cp, L), lambda n: (n, 0, 0)),   # per-batch activations
            pl.BlockSpec((Cp, 9 * Cp), lambda n: (0, 0)),       # shared folded conv1 W
            pl.BlockSpec((Cp, 9 * Cp), lambda n: (0, 0)),       # shared folded conv2 W
            pl.BlockSpec((6, L), lambda n: (0, 0)),             # shared masks
        ],
        out_specs=pl.BlockSpec((None, C, L), lambda n: (n, 0, 0)),
        compiler_params=pltpu.CompilerParams(
            dimension_semantics=("parallel",),
            vmem_limit_bytes=_vmem_limit_bytes(Cp, C, L),
        ),
    )(xz, w1p, w2p, masks)

    out = out_flat[:, :, :Lp].reshape(N, C, Hp, Wp)[:, :, 1:H + 1, 1:W + 1]
    return out


# ----------------------------- pure-JAX reference ----------------------------

def _reference(x, w1, b1, w2, b2):
    def conv(inp, w, b):
        xp = jnp.pad(inp, ((0, 0), (0, 0), (1, 1), (1, 1)), mode="reflect")
        y = jax.lax.conv_general_dilated(
            xp, w, window_strides=(1, 1), padding="VALID",
            dimension_numbers=("NCHW", "OIHW", "NCHW"))
        return y + b[None, :, None, None]

    def inorm(y):
        m = jnp.mean(y, axis=(2, 3), keepdims=True)
        v = jnp.mean((y - m) ** 2, axis=(2, 3), keepdims=True)
        return (y - m) * jax.lax.rsqrt(v + _EPS)

    h = jax.nn.relu(inorm(conv(x, w1, b1)))
    return x + inorm(conv(h, w2, b2))


# ----------------------------------- main ------------------------------------

if __name__ == "__main__":
    N, C, H, W = 2, 4, 16, 16

    key = jax.random.PRNGKey(0)
    kx, kw1, kb1, kw2, kb2 = jax.random.split(key, 5)

    x = jax.random.normal(kx, (N, C, H, W), dtype=jnp.float32)
    # Deterministic synthetic parameters (shapes match nn.Conv2d(C, C, 3)).
    fan_in = C * 3 * 3
    bound = 1.0 / (fan_in ** 0.5)
    w1 = jax.random.uniform(kw1, (C, C, 3, 3), jnp.float32, -bound, bound)
    b1 = jax.random.uniform(kb1, (C,), jnp.float32, -bound, bound)
    w2 = jax.random.uniform(kw2, (C, C, 3, 3), jnp.float32, -bound, bound)
    b2 = jax.random.uniform(kb2, (C,), jnp.float32, -bound, bound)

    out = residual_block(x, w1, b1, w2, b2)
    out = jax.block_until_ready(out)

    ref = _reference(x, w1, b1, w2, b2)
    max_err = float(jnp.max(jnp.abs(out - ref)))
    assert out.shape == (N, C, H, W)
    assert max_err < 5e-4, f"mismatch vs reference: {max_err}"

    print("KERNEL_OK")
</pallas_src>

<mosaic_0001>
module attributes {stable_mosaic.version = 11 : i64} {
  func.func @_fused_residual_block_kernel(%arg0: i32, %arg1: memref<1x8x384xf32, #tpu.memory_space<vmem>>, %arg2: memref<8x72xf32, #tpu.memory_space<vmem>>, %arg3: memref<8x72xf32, #tpu.memory_space<vmem>>, %arg4: memref<6x384xf32, #tpu.memory_space<vmem>>, %arg5: memref<1x4x384xf32, #tpu.memory_space<vmem>>) attributes {dimension_semantics = [#tpu.dimension_semantics<parallel>], iteration_bounds = array<i64: 2>, scalar_prefetch = 0 : i64, scratch_operands = 0 : i64, tpu.core_type = #tpu.core_type<tc>, window_params = [{transform_indices = @transform_0, window_bounds = array<i64: 1, 8, 384>}, {pipeline_mode = #tpu.pipeline_mode<synchronous>, transform_indices = @transform_1, window_bounds = array<i64: 8, 72>}, {pipeline_mode = #tpu.pipeline_mode<synchronous>, transform_indices = @transform_2, window_bounds = array<i64: 8, 72>}, {pipeline_mode = #tpu.pipeline_mode<synchronous>, transform_indices = @transform_3, window_bounds = array<i64: 6, 384>}, {transform_indices = @transform_4, window_bounds = array<i64: 1, 4, 384>}]} {
    %c0 = arith.constant 0 : index
    %c0_0 = arith.constant 0 : index
    %c0_1 = arith.constant 0 : index
    %0 = vector.load %arg1[%c0, %c0_0, %c0_1] : memref<1x8x384xf32, #tpu.memory_space<vmem>>, vector<1x8x384xf32>
    %1 = vector.shape_cast %0 : vector<1x8x384xf32> to vector<8x384xf32>
    %c0_2 = arith.constant 0 : index
    %c0_3 = arith.constant 0 : index
    %2 = vector.load %arg4[%c0_2, %c0_3] : memref<6x384xf32, #tpu.memory_space<vmem>>, vector<1x384xf32>
    %c1 = arith.constant 1 : index
    %c0_4 = arith.constant 0 : index
    %3 = vector.load %arg4[%c1, %c0_4] : memref<6x384xf32, #tpu.memory_space<vmem>>, vector<1x384xf32>
    %c2 = arith.constant 2 : index
    %c0_5 = arith.constant 0 : index
    %4 = vector.load %arg4[%c2, %c0_5] : memref<6x384xf32, #tpu.memory_space<vmem>>, vector<1x384xf32>
    %c3 = arith.constant 3 : index
    %c0_6 = arith.constant 0 : index
    %5 = vector.load %arg4[%c3, %c0_6] : memref<6x384xf32, #tpu.memory_space<vmem>>, vector<1x384xf32>
    %c4 = arith.constant 4 : index
    %c0_7 = arith.constant 0 : index
    %6 = vector.load %arg4[%c4, %c0_7] : memref<6x384xf32, #tpu.memory_space<vmem>>, vector<1x384xf32>
    %c5 = arith.constant 5 : index
    %c0_8 = arith.constant 0 : index
    %7 = vector.load %arg4[%c5, %c0_8] : memref<6x384xf32, #tpu.memory_space<vmem>>, vector<1x384xf32>
    %c348_i32 = arith.constant 348 : i32
    %8 = tpu.dynamic_rotate %1 by %c348_i32 dim 1 : vector<8x384xf32>, i32 -> vector<8x384xf32>
    %9 = vector.broadcast %4 : vector<1x384xf32> to vector<8x384xf32>
    %10 = arith.mulf %9, %8 : vector<8x384xf32>
    %11 = arith.addf %1, %10 : vector<8x384xf32>
    %c36_i32 = arith.constant 36 : i32
    %12 = tpu.dynamic_rotate %1 by %c36_i32 dim 1 : vector<8x384xf32>, i32 -> vector<8x384xf32>
    %13 = vector.broadcast %5 : vector<1x384xf32> to vector<8x384xf32>
    %14 = arith.mulf %13, %12 : vector<8x384xf32>
    %15 = arith.addf %11, %14 : vector<8x384xf32>
    %c382_i32 = arith.constant 382 : i32
    %16 = tpu.dynamic_rotate %15 by %c382_i32 dim 1 : vector<8x384xf32>, i32 -> vector<8x384xf32>
    %17 = vector.broadcast %6 : vector<1x384xf32> to vector<8x384xf32>
    %18 = arith.mulf %17, %16 : vector<8x384xf32>
    %19 = arith.addf %15, %18 : vector<8x384xf32>
    %c2_i32 = arith.constant 2 : i32
    %20 = tpu.dynamic_rotate %15 by %c2_i32 dim 1 : vector<8x384xf32>, i32 -> vector<8x384xf32>
    %21 = vector.broadcast %7 : vector<1x384xf32> to vector<8x384xf32>
    %22 = arith.mulf %21, %20 : vector<8x384xf32>
    %23 = arith.addf %19, %22 : vector<8x384xf32>
    %c19_i32 = arith.constant 19 : i32
    %24 = tpu.dynamic_rotate %23 by %c19_i32 dim 1 : vector<8x384xf32>, i32 -> vector<8x384xf32>
    %c18_i32 = arith.constant 18 : i32
    %25 = tpu.dynamic_rotate %23 by %c18_i32 dim 1 : vector<8x384xf32>, i32 -> vector<8x384xf32>
    %c17_i32 = arith.constant 17 : i32
    %26 = tpu.dynamic_rotate %23 by %c17_i32 dim 1 : vector<8x384xf32>, i32 -> vector<8x384xf32>
    %c1_i32 = arith.constant 1 : i32
    %27 = tpu.dynamic_rotate %23 by %c1_i32 dim 1 : vector<8x384xf32>, i32 -> vector<8x384xf32>
    %c383_i32 = arith.constant 383 : i32
    %28 = tpu.dynamic_rotate %23 by %c383_i32 dim 1 : vector<8x384xf32>, i32 -> vector<8x384xf32>
    %c367_i32 = arith.constant 367 : i32
    %29 = tpu.dynamic_rotate %23 by %c367_i32 dim 1 : vector<8x384xf32>, i32 -> vector<8x384xf32>
    %c366_i32 = arith.constant 366 : i32
    %30 = tpu.dynamic_rotate %23 by %c366_i32 dim 1 : vector<8x384xf32>, i32 -> vector<8x384xf32>
    %c365_i32 = arith.constant 365 : i32
    %31 = tpu.dynamic_rotate %23 by %c365_i32 dim 1 : vector<8x384xf32>, i32 -> vector<8x384xf32>
    %32 = tpu.concatenate %24, %25, %26, %27, %23, %28, %29, %30, %31 in 0 : vector<8x384xf32>, vector<8x384xf32>, vector<8x384xf32>, vector<8x384xf32>, vector<8x384xf32>, vector<8x384xf32>, vector<8x384xf32>, vector<8x384xf32>, vector<8x384xf32> -> vector<72x384xf32>
    %c0_9 = arith.constant 0 : index
    %c0_10 = arith.constant 0 : index
    %33 = vector.load %arg2[%c0_9, %c0_10] : memref<8x72xf32, #tpu.memory_space<vmem>>, vector<8x72xf32>
    %cst = arith.constant dense<0.000000e+00> : vector<8x384xf32>
    %34 = tpu.matmul %33, %32, %cst {dimension_numbers = #tpu.dot_dimension_numbers<[1], [0], [0], [1], [0, 0, 1, 1], [], []>} : vector<8x72xf32>, vector<72x384xf32>, vector<8x384xf32> -> vector<8x384xf32>
    %35 = vector.broadcast %2 : vector<1x384xf32> to vector<8x384xf32>
    %36 = arith.mulf %34, %35 : vector<8x384xf32>
    %cst_11 = arith.constant dense<0.000000e+00> : vector<8xf32>
    %37 = vector.multi_reduction <add>, %36, %cst_11 [1] : vector<8x384xf32> to vector<8xf32>
    %38 = vector.shape_cast %37 : vector<8xf32> to vector<8x1xf32>
    %39 = arith.mulf %36, %34 : vector<8x384xf32>
    %cst_12 = arith.constant dense<0.000000e+00> : vector<8xf32>
    %40 = vector.multi_reduction <add>, %39, %cst_12 [1] : vector<8x384xf32> to vector<8xf32>
    %41 = vector.shape_cast %40 : vector<8xf32> to vector<8x1xf32>
    %42 = arith.mulf %38, %38 : vector<8x1xf32>
    %43 = arith.subf %41, %42 : vector<8x1xf32>
    %44 = vector.broadcast %38 : vector<8x1xf32> to vector<8x384xf32>
    %45 = arith.subf %34, %44 : vector<8x384xf32>
    %cst_13 = arith.constant 9.99999974E-6 : f32
    %46 = vector.broadcast %cst_13 : f32 to vector<8x1xf32>
    %47 = arith.addf %43, %46 : vector<8x1xf32>
    %48 = math.rsqrt %47 : vector<8x1xf32>
    %49 = vector.broadcast %48 : vector<8x1xf32> to vector<8x384xf32>
    %50 = arith.mulf %45, %49 : vector<8x384xf32>
    %cst_14 = arith.constant 0.000000e+00 : f32
    %51 = vector.broadcast %cst_14 : f32 to vector<8x384xf32>
    %52 = arith.maximumf %50, %51 : vector<8x384xf32>
    %53 = vector.broadcast %3 : vector<1x384xf32> to vector<8x384xf32>
    %54 = arith.mulf %52, %53 : vector<8x384xf32>
    %c348_i32_15 = arith.constant 348 : i32
    %55 = tpu.dynamic_rotate %54 by %c348_i32_15 dim 1 : vector<8x384xf32>, i32 -> vector<8x384xf32>
    %56 = vector.broadcast %4 : vector<1x384xf32> to vector<8x384xf32>
    %57 = arith.mulf %56, %55 : vector<8x384xf32>
    %58 = arith.addf %54, %57 : vector<8x384xf32>
    %c36_i32_16 = arith.constant 36 : i32
    %59 = tpu.dynamic_rotate %54 by %c36_i32_16 dim 1 : vector<8x384xf32>, i32 -> vector<8x384xf32>
    %60 = vector.broadcast %5 : vector<1x384xf32> to vector<8x384xf32>
    %61 = arith.mulf %60, %59 : vector<8x384xf32>
    %62 = arith.addf %58, %61 : vector<8x384xf32>
    %c382_i32_17 = arith.constant 382 : i32
    %63 = tpu.dynamic_rotate %62 by %c382_i32_17 dim 1 : vector<8x384xf32>, i32 -> vector<8x384xf32>
    %64 = vector.broadcast %6 : vector<1x384xf32> to vector<8x384xf32>
    %65 = arith.mulf %64, %63 : vector<8x384xf32>
    %66 = arith.addf %62, %65 : vector<8x384xf32>
    %c2_i32_18 = arith.constant 2 : i32
    %67 = tpu.dynamic_rotate %62 by %c2_i32_18 dim 1 : vector<8x384xf32>, i32 -> vector<8x384xf32>
    %68 = vector.broadcast %7 : vector<1x384xf32> to vector<8x384xf32>
    %69 = arith.mulf %68, %67 : vector<8x384xf32>
    %70 = arith.addf %66, %69 : vector<8x384xf32>
    %c19_i32_19 = arith.constant 19 : i32
    %71 = tpu.dynamic_rotate %70 by %c19_i32_19 dim 1 : vector<8x384xf32>, i32 -> vector<8x384xf32>
    %c18_i32_20 = arith.constant 18 : i32
    %72 = tpu.dynamic_rotate %70 by %c18_i32_20 dim 1 : vector<8x384xf32>, i32 -> vector<8x384xf32>
    %c17_i32_21 = arith.constant 17 : i32
    %73 = tpu.dynamic_rotate %70 by %c17_i32_21 dim 1 : vector<8x384xf32>, i32 -> vector<8x384xf32>
    %c1_i32_22 = arith.constant 1 : i32
    %74 = tpu.dynamic_rotate %70 by %c1_i32_22 dim 1 : vector<8x384xf32>, i32 -> vector<8x384xf32>
    %c383_i32_23 = arith.constant 383 : i32
    %75 = tpu.dynamic_rotate %70 by %c383_i32_23 dim 1 : vector<8x384xf32>, i32 -> vector<8x384xf32>
    %c367_i32_24 = arith.constant 367 : i32
    %76 = tpu.dynamic_rotate %70 by %c367_i32_24 dim 1 : vector<8x384xf32>, i32 -> vector<8x384xf32>
    %c366_i32_25 = arith.constant 366 : i32
    %77 = tpu.dynamic_rotate %70 by %c366_i32_25 dim 1 : vector<8x384xf32>, i32 -> vector<8x384xf32>
    %c365_i32_26 = arith.constant 365 : i32
    %78 = tpu.dynamic_rotate %70 by %c365_i32_26 dim 1 : vector<8x384xf32>, i32 -> vector<8x384xf32>
    %79 = tpu.concatenate %71, %72, %73, %74, %70, %75, %76, %77, %78 in 0 : vector<8x384xf32>, vector<8x384xf32>, vector<8x384xf32>, vector<8x384xf32>, vector<8x384xf32>, vector<8x384xf32>, vector<8x384xf32>, vector<8x384xf32>, vector<8x384xf32> -> vector<72x384xf32>
    %c0_27 = arith.constant 0 : index
    %c0_28 = arith.constant 0 : index
    %80 = vector.load %arg3[%c0_27, %c0_28] : memref<8x72xf32, #tpu.memory_space<vmem>>, vector<8x72xf32>
    %cst_29 = arith.constant dense<0.000000e+00> : vector<8x384xf32>
    %81 = tpu.matmul %80, %79, %cst_29 {dimension_numbers = #tpu.dot_dimension_numbers<[1], [0], [0], [1], [0, 0, 1, 1], [], []>} : vector<8x72xf32>, vector<72x384xf32>, vector<8x384xf32> -> vector<8x384xf32>
    %82 = vector.broadcast %2 : vector<1x384xf32> to vector<8x384xf32>
    %83 = arith.mulf %81, %82 : vector<8x384xf32>
    %cst_30 = arith.constant dense<0.000000e+00> : vector<8xf32>
    %84 = vector.multi_reduction <add>, %83, %cst_30 [1] : vector<8x384xf32> to vector<8xf32>
    %85 = vector.shape_cast %84 : vector<8xf32> to vector<8x1xf32>
    %86 = arith.mulf %83, %81 : vector<8x384xf32>
    %cst_31 = arith.constant dense<0.000000e+00> : vector<8xf32>
    %87 = vector.multi_reduction <add>, %86, %cst_31 [1] : vector<8x384xf32> to vector<8xf32>
    %88 = vector.shape_cast %87 : vector<8xf32> to vector<8x1xf32>
    %89 = arith.mulf %85, %85 : vector<8x1xf32>
    %90 = arith.subf %88, %89 : vector<8x1xf32>
    %91 = vector.broadcast %85 : vector<8x1xf32> to vector<8x384xf32>
    %92 = arith.subf %81, %91 : vector<8x384xf32>
    %cst_32 = arith.constant 9.99999974E-6 : f32
    %93 = vector.broadcast %cst_32 : f32 to vector<8x1xf32>
    %94 = arith.addf %90, %93 : vector<8x1xf32>
    %95 = math.rsqrt %94 : vector<8x1xf32>
    %96 = vector.broadcast %95 : vector<8x1xf32> to vector<8x384xf32>
    %97 = arith.mulf %92, %96 : vector<8x384xf32>
    %98 = vector.extract_strided_slice %1 {offsets = [0, 0], sizes = [4, 384], strides = [1, 1]} : vector<8x384xf32> to vector<4x384xf32>
    %99 = vector.extract_strided_slice %97 {offsets = [0, 0], sizes = [4, 384], strides = [1, 1]} : vector<8x384xf32> to vector<4x384xf32>
    %100 = arith.addf %98, %99 : vector<4x384xf32>
    %c0_33 = arith.constant 0 : index
    %c0_34 = arith.constant 0 : index
    %c0_35 = arith.constant 0 : index
    %101 = vector.load %arg5[%c0_33, %c0_34, %c0_35] : memref<1x4x384xf32, #tpu.memory_space<vmem>>, vector<1x4x384xf32>
    %102 = vector.shape_cast %101 : vector<1x4x384xf32> to vector<4x384xf32>
    %103 = vector.shape_cast %100 : vector<4x384xf32> to vector<1x4x384xf32>
    tpu.vector_store %arg5[%c0_33, %c0_34, %c0_35], %103 {strides = array<i32>} : memref<1x4x384xf32, #tpu.memory_space<vmem>>, vector<1x4x384xf32>,
    return
  }
  func.func @transform_0(%arg0: i32) -> (i32, i32, i32) {
    %c0_i32 = arith.constant 0 : i32
    %c0_i32_0 = arith.constant 0 : i32
    %c0_i32_1 = arith.constant 0 : i32
    return %arg0, %c0_i32, %c0_i32_0 : i32, i32, i32
  }
  func.func @transform_1(%arg0: i32) -> (i32, i32) {
    %c0_i32 = arith.constant 0 : i32
    %c0_i32_0 = arith.constant 0 : i32
    %c0_i32_1 = arith.constant 0 : i32
    return %c0_i32, %c0_i32_0 : i32, i32
  }
  func.func @transform_2(%arg0: i32) -> (i32, i32) {
    %c0_i32 = arith.constant 0 : i32
    %c0_i32_0 = arith.constant 0 : i32
    %c0_i32_1 = arith.constant 0 : i32
    return %c0_i32, %c0_i32_0 : i32, i32
  }
  func.func @transform_3(%arg0: i32) -> (i32, i32) {
    %c0_i32 = arith.constant 0 : i32
    %c0_i32_0 = arith.constant 0 : i32
    %c0_i32_1 = arith.constant 0 : i32
    return %c0_i32, %c0_i32_0 : i32, i32
  }
  func.func @transform_4(%arg0: i32) -> (i32, i32, i32) {
    %c0_i32 = arith.constant 0 : i32
    %c0_i32_0 = arith.constant 0 : i32
    %c0_i32_1 = arith.constant 0 : i32
    return %arg0, %c0_i32, %c0_i32_0 : i32, i32, i32
  }
}

</mosaic_0001>

<llo_original>
// kernel: residual_block.1
$region0: #{residual_block.1}
  #allocation0 [shape = 'u32[]', space=smem, size = 0x4, offset = 0x4, fixed_abs, tag = 'smem constant byte address 0x4 - core index']
  #allocation1 [shape = 'u32[144,128]{1,0:T(1,128)}', space=vmem, size = 0x12000, scoped, tag = 'internal scratch']
  %s0 = inlined_call_operand.vmem [shape: f32[2,8,384], index: 0, kind: input, shape index: {}]
  %s1 = inlined_call_operand.vmem [shape: f32[8,72], index: 1, kind: input, shape index: {}]
  %s2 = inlined_call_operand.vmem [shape: f32[8,72], index: 2, kind: input, shape index: {}]
  %s3 = inlined_call_operand.vmem [shape: f32[6,384], index: 3, kind: input, shape index: {}]
  %s4 = inlined_call_operand.vmem [shape: f32[2,4,384], index: 4, kind: output, shape index: {}]
  %s5 = sld [smem:[#allocation0]]
  $region49: #{residual_block.1} parent=0
    _
  %s7 = ssub.s32 1, %s5
  %s8 = scalar_select 0, %s7, %s5
  loop: start=0, step=1, limit=4
  $region2: #{residual_block.1} parent=0 // loop_pre_header
    _
  $region3: #{residual_block.1} parent=0 // loop_header
    %s10 = sphi 0, %s14
    %p11 = scmp.ge.s32.totalorder %s10, 4
    %s20 = sphi 0, %s22
    %s23 = sphi 0, %s20
    %s24 = sphi 0, %s23
    %s40 = sphi 0, %s24
    %s44 = sphi 0, %s44
    %s46 = sphi 0, %s44
    %s47 = sphi 0, %s46
    %s61 = sphi 0, %s47
    %s65 = sphi 0, %s65
    %s67 = sphi 0, %s65
    %s68 = sphi 0, %s67
    %s82 = sphi 0, %s68
    %s86 = sphi 0, %s86
    %s88 = sphi 0, %s86
    %s89 = sphi 0, %s88
    %s103 = sphi 0, %s89
    %s109 = sphi 0, %s111
    %s112 = sphi 0, %s109
    %s113 = sphi 0, %s112
    %s129 = sphi 0, %s113
  $region4: #{residual_block.1} parent=0 // loop_header_branch
    %13 = sbr.rel (%p11) target = $region8
  $region5: #{residual_block.1} parent=0 // loop_body
    %s15 = ssub.s32 %s10, 1
    %s16 = ssub.s32 %s10, 2
    %s17 = sadd.s32 %s10, 1
    %s18 = ssub.s32 %s10, %s17
    %p19 = scmp.eq.s32.totalorder %s18, 0
    %s21 = sadd.s32 %s20, 1
    %s22 = scalar_select %p19, %s20, %s21
    %p25 = pneg %p19
    %p26 = scmp.eq.s32.totalorder %s10, 1
    %p27 = por %p25, %p26
    %p28 = scmp.ne.s32.totalorder %s20, %s23
    %p29 = scmp.eq.s32.totalorder %s10, 0
    %p30 = por %p28, %p29
    %p31 = scmp.ne.s32.totalorder %s20, %s23
    %p32 = scmp.eq.s32.totalorder %s15, 1
    %p33 = por %p31, %p32
    %p34 = scmp.ne.s32.totalorder %s23, %s24
    %p35 = scmp.eq.s32.totalorder %s15, 0
    %p36 = por %p34, %p35
    %p37 = scmp.ne.s32.totalorder %s23, %s24
    %p38 = scmp.eq.s32.totalorder %s16, 1
    %p39 = por %p37, %p38
    %p41 = scmp.ne.s32.totalorder %s24, %s40
    %p42 = scmp.eq.s32.totalorder %s16, 0
    %p43 = por %p41, %p42
    %s45 = sadd.s32 %s44, 1
    %p48 = scmp.eq.s32.totalorder %s10, 1
    %p49 = scmp.ne.s32.totalorder %s44, %s46
    %p50 = scmp.eq.s32.totalorder %s10, 0
    %p51 = por %p49, %p50
    %p52 = scmp.ne.s32.totalorder %s44, %s46
    %p53 = scmp.eq.s32.totalorder %s15, 1
    %p54 = por %p52, %p53
    %p55 = scmp.ne.s32.totalorder %s46, %s47
    %p56 = scmp.eq.s32.totalorder %s15, 0
    %p57 = por %p55, %p56
    %p58 = scmp.ne.s32.totalorder %s46, %s47
    %p59 = scmp.eq.s32.totalorder %s16, 1
    %p60 = por %p58, %p59
    %p62 = scmp.ne.s32.totalorder %s47, %s61
    %p63 = scmp.eq.s32.totalorder %s16, 0
    %p64 = por %p62, %p63
    %s66 = sadd.s32 %s65, 1
    %p69 = scmp.eq.s32.totalorder %s10, 1
    %p70 = scmp.ne.s32.totalorder %s65, %s67
    %p71 = scmp.eq.s32.totalorder %s10, 0
    %p72 = por %p70, %p71
    %p73 = scmp.ne.s32.totalorder %s65, %s67
    %p74 = scmp.eq.s32.totalorder %s15, 1
    %p75 = por %p73, %p74
    %p76 = scmp.ne.s32.totalorder %s67, %s68
    %p77 = scmp.eq.s32.totalorder %s15, 0
    %p78 = por %p76, %p77
    %p79 = scmp.ne.s32.totalorder %s67, %s68
    %p80 = scmp.eq.s32.totalorder %s16, 1
    %p81 = por %p79, %p80
    %p83 = scmp.ne.s32.totalorder %s68, %s82
    %p84 = scmp.eq.s32.totalorder %s16, 0
    %p85 = por %p83, %p84
    %s87 = sadd.s32 %s86, 1
    %p90 = scmp.eq.s32.totalorder %s10, 1
    %p91 = scmp.ne.s32.totalorder %s86, %s88
    %p92 = scmp.eq.s32.totalorder %s10, 0
    %p93 = por %p91, %p92
    %p94 = scmp.ne.s32.totalorder %s86, %s88
    %p95 = scmp.eq.s32.totalorder %s15, 1
    %p96 = por %p94, %p95
    %p97 = scmp.ne.s32.totalorder %s88, %s89
    %p98 = scmp.eq.s32.totalorder %s15, 0
    %p99 = por %p97, %p98
    %p100 = scmp.ne.s32.totalorder %s88, %s89
    %p101 = scmp.eq.s32.totalorder %s16, 1
    %p102 = por %p100, %p101
    %p104 = scmp.ne.s32.totalorder %s89, %s103
    %p105 = scmp.eq.s32.totalorder %s16, 0
    %p106 = por %p104, %p105
    %s107 = ssub.s32 %s10, %s17
    %p108 = scmp.eq.s32.totalorder %s107, 0
    %s110 = sadd.s32 %s109, 1
    %s111 = scalar_select %p108, %s109, %s110
    %p114 = pneg %p108
    %p115 = scmp.eq.s32.totalorder %s10, 1
    %p116 = por %p114, %p115
    %p117 = scmp.ne.s32.totalorder %s109, %s112
    %p118 = scmp.eq.s32.totalorder %s10, 0
    %p119 = por %p117, %p118
    %p120 = scmp.ne.s32.totalorder %s109, %s112
    %p121 = scmp.eq.s32.totalorder %s15, 1
    %p122 = por %p120, %p121
    %p123 = scmp.ne.s32.totalorder %s112, %s113
    %p124 = scmp.eq.s32.totalorder %s15, 0
    %p125 = por %p123, %p124
    %p126 = scmp.ne.s32.totalorder %s112, %s113
    %p127 = scmp.eq.s32.totalorder %s16, 1
    %p128 = por %p126, %p127
    %p130 = scmp.ne.s32.totalorder %s113, %s129
    %p131 = scmp.eq.s32.totalorder %s16, 0
    %p132 = por %p130, %p131
    %p133 = scmp.le.s32.totalorder 1, %s10
    %p134 = scmp.lt.s32.totalorder %s10, 3
    %p135 = pnand %p133, %p134
    %p136 = pneg %p135
    // Predicated region
    $region9: #{residual_block.1} parent=5 // pred_check
      _
    $region10: #{residual_block.1} parent=5 // pred_check_branch
      %138 = sbr.rel (%p135) target = $region12
    $region11: #{residual_block.1} parent=5 // pred_region
      %s139 = ssub.s32 %s10, 1
      // Predicated region
      $region13: #{residual_block.1} parent=11 // pred_check
        %p140 = pneg %p57
      $region14: #{residual_block.1} parent=11 // pred_check_branch
        %142 = sbr.rel (%p140) target = $region16
      $region15: #{residual_block.1} parent=11 // pred_region
        _
      $region16: #{residual_block.1} parent=11 // pred_fallthru
        _
      // Predicated region
      $region17: #{residual_block.1} parent=11 // pred_check
        %p143 = pneg %p78
      $region18: #{residual_block.1} parent=11 // pred_check_branch
        %145 = sbr.rel (%p143) target = $region20
      $region19: #{residual_block.1} parent=11 // pred_region
        _
      $region20: #{residual_block.1} parent=11 // pred_fallthru
        _
      // Predicated region
      $region21: #{residual_block.1} parent=11 // pred_check
        %p146 = pneg %p99
      $region22: #{residual_block.1} parent=11 // pred_check_branch
        %148 = sbr.rel (%p146) target = $region24
      $region23: #{residual_block.1} parent=11 // pred_region
        _
      $region24: #{residual_block.1} parent=11 // pred_fallthru
        _
    $region12: #{residual_block.1} parent=5 // pred_fallthru
      _
    %p149 = scmp.lt.s32.totalorder %s10, 2
    // Predicated region
    $region25: #{residual_block.1} parent=5 // pred_check
      %p150 = pneg %p149
    $region26: #{residual_block.1} parent=5 // pred_check_branch
      %152 = sbr.rel (%p150) target = $region28
    $region27: #{residual_block.1} parent=5 // pred_region
      // Predicated region
      $region29: #{residual_block.1} parent=27 // pred_check
        %p153 = pneg %p30
      $region30: #{residual_block.1} parent=27 // pred_check_branch
        %155 = sbr.rel (%p153) target = $region32
      $region31: #{residual_block.1} parent=27 // pred_region
        %p156 = scmp.lt.s32.totalorder %s10, 1
        %s157 = scalar_select %p156, %s10, 1
        %s158 = smul.addr %s157, 3
        %s159 = smul.addr %s158, 8
        %s160 = scalar_lea.vmem %s0, %s159
      $region32: #{residual_block.1} parent=27 // pred_fallthru
        _
    $region28: #{residual_block.1} parent=5 // pred_fallthru
      _
    %p161 = scmp.le.s32.totalorder 1, %s10
    %p162 = scmp.lt.s32.totalorder %s10, 3
    %p163 = pnand %p161, %p162
    %p164 = pneg %p163
    // Predicated region
    $region33: #{residual_block.1} parent=5 // pred_check
      _
    $region34: #{residual_block.1} parent=5 // pred_check_branch
      %166 = sbr.rel (%p163) target = $region36
    $region35: #{residual_block.1} parent=5 // pred_region
      %s167 = ssub.s32 %s10, 1
      %p168 = scmp.lt.s32.totalorder %s15, 1
      %s169 = scalar_select %p168, %s15, 1
      %s170 = smul.addr %s169, 3
      %s171 = smul.addr %s170, 8
      %s172 = scalar_lea.vmem %s0, %s171
      %p173 = pneg %p36
      %p174 = pneg %p33
      %p175 = pneg %p57
      %p176 = pneg %p54
      %p177 = pneg %p78
      %p178 = pneg %p75
      %p179 = pneg %p99
      %p180 = pneg %p96
      %p181 = pneg %p125
      %p182 = pneg %p122
      %p183 = scmp.lt.s32.totalorder %s15, 1
      %s184 = scalar_select %p183, %s15, 1
      %s185 = smul.addr %s184, 3
      %s186 = smul.addr %s185, 4
      %s187 = scalar_lea.vmem %s4, %s186
      %p188 = scmp.lt.s32.totalorder %s15, 1
      %s189 = scalar_select %p188, %s15, 1
      %s190 = smul.addr %s189, 3
      %s191 = smul.addr %s190, 8
      %s192 = scalar_lea.vmem %s0, %s191
      %p193 = scmp.lt.s32.totalorder %s15, 1
      %s194 = scalar_select %p193, %s15, 1
      %s195 = smul.addr %s194, 3
      %s196 = smul.addr %s195, 4
      %s197 = scalar_lea.vmem %s4, %s196
      %v198 = vld [vmem:[%s192] sm:$0xff]
      %v199 = vld [vmem:[%s192 + $0x8] sm:$0xff]
      %v200 = vld [vmem:[%s192 + $0x10] sm:$0xff]
      %v201 = vld [vmem:[%s3] ss:$8 sm:$0x7]
      %s202 = scalar_lea.vmem %s3, 1
      %v203 = vld [vmem:[%s202] ss:$8 sm:$0x7]
      %s204 = scalar_lea.vmem %s3, 2
      %v205 = vld [vmem:[%s204] ss:$8 sm:$0x7]
      %s206 = scalar_lea.vmem %s3, 3
      %v207 = vld [vmem:[%s206] ss:$8 sm:$0x7]
      %s208 = scalar_lea.vmem %s3, 4
      %v209 = vld [vmem:[%s208] ss:$8 sm:$0x7]
      %s210 = scalar_lea.vmem %s3, 5
      %v211 = vld [vmem:[%s210] ss:$8 sm:$0x7]
      %212 = vrot.lane.b32.xlu0 %v198, 92
      %v213 = vpop.permute.xlu0 %212
      %214 = vrot.lane.b32.xlu0 %v199, 92
      %v215 = vpop.permute.xlu0 %214
      %216 = vrot.lane.b32.xlu0 %v200, 92
      %v217 = vpop.permute.xlu0 %216
      %v218 = vlaneseq
      %v219 = vand.u32 %v218, 127
      %vm220 = vcmp.lt.s32.totalorder %v219, 92
      %v221 = vsel %vm220, %v215, %v217
      %v222 = vsel %vm220, %v213, %v215
      %v223 = vsel %vm220, %v217, %v213
      %v225 = vlaneseq
      %v226 = vshrl.u32 %v225, 7
      %v227 = vsub.s32 0, %v226
      %v228 = vrot.slane %v205, %v227
      %v229 = vlaneseq
      %v230 = vshrl.u32 %v229, 7
      %v231 = vsub.s32 1, %v230
      %v232 = vrot.slane %v205, %v231
      %v233 = vlaneseq
      %v234 = vshrl.u32 %v233, 7
      %v235 = vsub.s32 2, %v234
      %v236 = vrot.slane %v205, %v235
      %v240 = vmul.f32 %v228, %v222
      %v241 = vmul.f32 %v232, %v221
      %v242 = vmul.f32 %v236, %v223
      %v243 = vadd.f32 %v198, %v240
      %v244 = vadd.f32 %v199, %v241
      %v245 = vadd.f32 %v200, %v242
      %246 = vrot.lane.b32.xlu0 %v198, 36
      %v247 = vpop.permute.xlu0 %246
      %248 = vrot.lane.b32.xlu0 %v199, 36
      %v249 = vpop.permute.xlu0 %248
      %250 = vrot.lane.b32.xlu0 %v200, 36
      %v251 = vpop.permute.xlu0 %250
      %vm252 = vcmp.lt.s32.totalorder %v219, 36
      %v253 = vsel %vm252, %v249, %v251
      %v254 = vsel %vm252, %v247, %v249
      %v255 = vsel %vm252, %v251, %v247
      %v257 = vlaneseq
      %v258 = vshrl.u32 %v257, 7
      %v259 = vsub.s32 0, %v258
      %v260 = vrot.slane %v207, %v259
      %v261 = vlaneseq
      %v262 = vshrl.u32 %v261, 7
      %v263 = vsub.s32 1, %v262
      %v264 = vrot.slane %v207, %v263
      %v265 = vlaneseq
      %v266 = vshrl.u32 %v265, 7
      %v267 = vsub.s32 2, %v266
      %v268 = vrot.slane %v207, %v267
      %v272 = vmul.f32 %v260, %v255
      %v273 = vmul.f32 %v264, %v254
      %v274 = vmul.f32 %v268, %v253
      %v275 = vadd.f32 %v243, %v272
      %v276 = vadd.f32 %v244, %v273
      %v277 = vadd.f32 %v245, %v274
      %278 = vrot.lane.b32.xlu0 %v275, 126
      %v279 = vpop.permute.xlu0 %278
      %280 = vrot.lane.b32.xlu0 %v276, 126
      %v281 = vpop.permute.xlu0 %280
      %282 = vrot.lane.b32.xlu0 %v277, 126
      %v283 = vpop.permute.xlu0 %282
      %vm284 = vcmp.lt.s32.totalorder %v219, 126
      %v285 = vsel %vm284, %v281, %v283
      %v286 = vsel %vm284, %v279, %v281
      %v287 = vsel %vm284, %v283, %v279
      %v289 = vlaneseq
      %v290 = vshrl.u32 %v289, 7
      %v291 = vsub.s32 0, %v290
      %v292 = vrot.slane %v209, %v291
      %v293 = vlaneseq
      %v294 = vshrl.u32 %v293, 7
      %v295 = vsub.s32 1, %v294
      %v296 = vrot.slane %v209, %v295
      %v297 = vlaneseq
      %v298 = vshrl.u32 %v297, 7
      %v299 = vsub.s32 2, %v298
      %v300 = vrot.slane %v209, %v299
      %v304 = vmul.f32 %v292, %v286
      %v305 = vmul.f32 %v296, %v285
      %v306 = vmul.f32 %v300, %v287
      %v307 = vadd.f32 %v275, %v304
      %v308 = vadd.f32 %v276, %v305
      %v309 = vadd.f32 %v277, %v306
      %310 = vrot.lane.b32.xlu0 %v275, 2
      %v311 = vpop.permute.xlu0 %310
      %312 = vrot.lane.b32.xlu0 %v276, 2
      %v313 = vpop.permute.xlu0 %312
      %314 = vrot.lane.b32.xlu0 %v277, 2
      %v315 = vpop.permute.xlu0 %314
      %vm316 = vcmp.lt.s32.totalorder %v219, 2
      %v317 = vsel %vm316, %v313, %v315
      %v318 = vsel %vm316, %v311, %v313
      %v319 = vsel %vm316, %v315, %v311
      %v321 = vlaneseq
      %v322 = vshrl.u32 %v321, 7
      %v323 = vsub.s32 0, %v322
      %v324 = vrot.slane %v211, %v323
      %v325 = vlaneseq
      %v326 = vshrl.u32 %v325, 7
      %v327 = vsub.s32 1, %v326
      %v328 = vrot.slane %v211, %v327
      %v329 = vlaneseq
      %v330 = vshrl.u32 %v329, 7
      %v331 = vsub.s32 2, %v330
      %v332 = vrot.slane %v211, %v331
      %v336 = vmul.f32 %v324, %v319
      %v337 = vmul.f32 %v328, %v318
      %v338 = vmul.f32 %v332, %v317
      %v339 = vadd.f32 %v307, %v336
      %v340 = vadd.f32 %v308, %v337
      %v341 = vadd.f32 %v309, %v338
      %342 = vrot.lane.b32.xlu0 %v339, 19
      %v343 = vpop.permute.xlu0 %342
      %344 = vrot.lane.b32.xlu0 %v340, 19
      %v345 = vpop.permute.xlu0 %344
      %346 = vrot.lane.b32.xlu0 %v341, 19
      %v347 = vpop.permute.xlu0 %346
      %vm348 = vcmp.lt.s32.totalorder %v219, 19
      %v349 = vsel %vm348, %v345, %v347
      %v350 = vsel %vm348, %v343, %v345
      %v351 = vsel %vm348, %v347, %v343
      %352 = vrot.lane.b32.xlu0 %v339, 18
      %v353 = vpop.permute.xlu0 %352
      %354 = vrot.lane.b32.xlu0 %v340, 18
      %v355 = vpop.permute.xlu0 %354
      %356 = vrot.lane.b32.xlu0 %v341, 18
      %v357 = vpop.permute.xlu0 %356
      %vm358 = vcmp.lt.s32.totalorder %v219, 18
      %v359 = vsel %vm358, %v355, %v357
      %v360 = vsel %vm358, %v353, %v355
      %v361 = vsel %vm358, %v357, %v353
      %362 = vrot.lane.b32.xlu0 %v339, 17
      %v363 = vpop.permute.xlu0 %362
      %364 = vrot.lane.b32.xlu0 %v340, 17
      %v365 = vpop.permute.xlu0 %364
      %366 = vrot.lane.b32.xlu0 %v341, 17
      %v367 = vpop.permute.xlu0 %366
      %vm368 = vcmp.lt.s32.totalorder %v219, 17
      %v369 = vsel %vm368, %v365, %v367
      %v370 = vsel %vm368, %v363, %v365
      %v371 = vsel %vm368, %v367, %v363
      %372 = vrot.lane.b32.xlu0 %v339, 1
      %v373 = vpop.permute.xlu0 %372
      %374 = vrot.lane.b32.xlu0 %v340, 1
      %v375 = vpop.permute.xlu0 %374
      %376 = vrot.lane.b32.xlu0 %v341, 1
      %v377 = vpop.permute.xlu0 %376
      %vm378 = vcmp.lt.s32.totalorder %v219, 1
      %v379 = vsel %vm378, %v375, %v377
      %v380 = vsel %vm378, %v373, %v375
      %v381 = vsel %vm378, %v377, %v373
      %382 = vrot.lane.b32.xlu0 %v339, 127
      %v383 = vpop.permute.xlu0 %382
      %384 = vrot.lane.b32.xlu0 %v340, 127
      %v385 = vpop.permute.xlu0 %384
      %386 = vrot.lane.b32.xlu0 %v341, 127
      %v387 = vpop.permute.xlu0 %386
      %vm388 = vcmp.lt.s32.totalorder %v219, 127
      %v389 = vsel %vm388, %v385, %v387
      %v390 = vsel %vm388, %v383, %v385
      %v391 = vsel %vm388, %v387, %v383
      %392 = vrot.lane.b32.xlu0 %v339, 111
      %v393 = vpop.permute.xlu0 %392
      %394 = vrot.lane.b32.xlu0 %v340, 111
      %v395 = vpop.permute.xlu0 %394
      %396 = vrot.lane.b32.xlu0 %v341, 111
      %v397 = vpop.permute.xlu0 %396
      %vm398 = vcmp.lt.s32.totalorder %v219, 111
      %v399 = vsel %vm398, %v395, %v397
      %v400 = vsel %vm398, %v393, %v395
      %v401 = vsel %vm398, %v397, %v393
      %402 = vrot.lane.b32.xlu0 %v339, 110
      %v403 = vpop.permute.xlu0 %402
      %404 = vrot.lane.b32.xlu0 %v340, 110
      %v405 = vpop.permute.xlu0 %404
      %406 = vrot.lane.b32.xlu0 %v341, 110
      %v407 = vpop.permute.xlu0 %406
      %vm408 = vcmp.lt.s32.totalorder %v219, 110
      %v409 = vsel %vm408, %v405, %v407
      %v410 = vsel %vm408, %v403, %v405
      %v411 = vsel %vm408, %v407, %v403
      %412 = vrot.lane.b32.xlu0 %v339, 109
      %v413 = vpop.permute.xlu0 %412
      %414 = vrot.lane.b32.xlu0 %v340, 109
      %v415 = vpop.permute.xlu0 %414
      %416 = vrot.lane.b32.xlu0 %v341, 109
      %v417 = vpop.permute.xlu0 %416
      %vm418 = vcmp.lt.s32.totalorder %v219, 109
      %v419 = vsel %vm418, %v415, %v417
      %v420 = vsel %vm418, %v413, %v415
      %v421 = vsel %vm418, %v417, %v413
      %v422 = vld [vmem:[%s1] sm:$0xff]
      %vm423 = vcmask 588800
      %v425 = vsel %vm423, %v422, 0
      %427 = vmatprep.subr.mxu0 %v350
      %428 = vmatpush1.msra.mxu0 %v351
      %429 = vmatprep.subr.mxu0 %v360
      %430 = vmatpush1.msra.mxu0 %v361
      %431 = vmatprep.subr.mxu0 %v370
      %432 = vmatpush1.msra.mxu0 %v371
      %433 = vmatprep.subr.mxu0 %v380
      %434 = vmatpush1.msra.mxu0 %v381
      %435 = vmatprep.subr.mxu0 %v340
      %436 = vmatpush1.msra.mxu0 %v339
      %437 = vmatprep.subr.mxu0 %v389
      %438 = vmatpush1.msra.mxu0 %v390
      %439 = vmatprep.subr.mxu0 %v399
      %440 = vmatpush1.msra.mxu0 %v400
      %441 = vmatprep.subr.mxu0 %v409
      %442 = vmatpush1.msra.mxu0 %v410
      %443 = vmatprep.subr.mxu0 %v419
      %444 = vmatpush1.msra.mxu0 %v420
      %445 = vmatprep.subr.mxu0 0.0
      %446 = vmatpush1.msra.mxu0 0.0
      %447 = vmatprep.subr.mxu0 0.0
      %448 = vmatpush1.msra.mxu0 0.0
      %449 = vmatprep.subr.mxu0 0.0
      %450 = vmatpush1.msra.mxu0 0.0
      %451 = vmatprep.subr.mxu0 0.0
      %452 = vmatpush1.msra.mxu0 0.0
      %453 = vmatprep.subr.mxu0 0.0
      %454 = vmatpush1.msra.mxu0 0.0
      %455 = vmatprep.subr.mxu0 0.0
      %456 = vmatpush1.msra.mxu0 0.0
      %457 = vmatprep.subr.mxu0 0.0
      %458 = vmatpush1.msra.mxu0 0.0
      %459 = vmatprep.subr.mxu0 0.0
      %460 = vmatpush1.msra.mxu0 0.0
      %461 = vmatprep.subr.mxu0 0.0
      %462 = vmatpush1.msra.mxu0 0.0
      %463 = vmatprep.subr.mxu0 0.0
      %464 = vmatpush1.msra.mxu0 0.0
      %465 = vmatprep.subr.mxu0 0.0
      %466 = vmatpush1.msra.mxu0 0.0
      %467 = vmatprep.subr.mxu0 0.0
      %468 = vmatpush1.msra.mxu0 0.0
      %469 = vmatprep.subr.mxu0 0.0
      %470 = vmatpush1.msra.mxu0 0.0
      %471 = vmatprep.subr.mxu0 0.0
      %472 = vmatpush1.msra.mxu0 0.0
      %473 = vmatprep.subr.mxu0 0.0
      %474 = vmatpush1.msra.mxu0 0.0
      %475 = vmatprep.subr.mxu0 0.0
      %476 = vmatpush1.msra.mxu0 0.0
      %477 = vmatprep.subr.mxu0 0.0
      %478 = vmatpush1.msra.mxu0 0.0
      %479 = vmatprep.subr.mxu0 0.0
      %480 = vmatpush1.msra.mxu0 0.0
      %481 = vmatprep.subr.mxu0 0.0
      %482 = vmatpush1.msra.mxu0 0.0
      %483 = vmatprep.subr.mxu0 0.0
      %484 = vmatpush1.msra.mxu0 0.0
      %485 = vmatprep.subr.mxu0 0.0
      %486 = vmatpush1.msra.mxu0 0.0
      %487 = vmatprep.subr.mxu0 0.0
      %488 = vmatpush1.msra.mxu0 0.0
      %489 = vmatprep.subr.mxu0 0.0
      %490 = vmatpush1.msra.mxu0 0.0
      %491 = vmatprep.mubr.f32.mxu0 0.0
      %492 = vmatmul.mubr.f32.gmra.mrb[0].mxu0 %v425
      %v493 = vpop.f32.mrb[0].mxu0
      %v494 = vadd.f32 0.0, %v493
      %v495 = vpop.f32.mrb[0].mxu0
      %v496 = vadd.f32 0.0, %v495
      %497 = vdwg.mxu0
      %498 = vmatprep.subr.mxu0 0.0
      %499 = vmatpush1.msra.mxu0 %v349
      %500 = vmatprep.subr.mxu0 0.0
      %501 = vmatpush1.msra.mxu0 %v359
      %502 = vmatprep.subr.mxu0 0.0
      %503 = vmatpush1.msra.mxu0 %v369
      %504 = vmatprep.subr.mxu0 0.0
      %505 = vmatpush1.msra.mxu0 %v379
      %506 = vmatprep.subr.mxu0 0.0
      %507 = vmatpush1.msra.mxu0 %v341
      %508 = vmatprep.subr.mxu0 0.0
      %509 = vmatpush1.msra.mxu0 %v391
      %510 = vmatprep.subr.mxu0 0.0
      %511 = vmatpush1.msra.mxu0 %v401
      %512 = vmatprep.subr.mxu0 0.0
      %513 = vmatpush1.msra.mxu0 %v411
      %514 = vmatprep.subr.mxu0 0.0
      %515 = vmatpush1.msra.mxu0 %v421
      %516 = vmatprep.subr.mxu0 0.0
      %517 = vmatpush1.msra.mxu0 0.0
      %518 = vmatprep.subr.mxu0 0.0
      %519 = vmatpush1.msra.mxu0 0.0
      %520 = vmatprep.subr.mxu0 0.0
      %521 = vmatpush1.msra.mxu0 0.0
      %522 = vmatprep.subr.mxu0 0.0
      %523 = vmatpush1.msra.mxu0 0.0
      %524 = vmatprep.subr.mxu0 0.0
      %525 = vmatpush1.msra.mxu0 0.0
      %526 = vmatprep.subr.mxu0 0.0
      %527 = vmatpush1.msra.mxu0 0.0
      %528 = vmatprep.subr.mxu0 0.0
      %529 = vmatpush1.msra.mxu0 0.0
      %530 = vmatprep.subr.mxu0 0.0
      %531 = vmatpush1.msra.mxu0 0.0
      %532 = vmatprep.subr.mxu0 0.0
      %533 = vmatpush1.msra.mxu0 0.0
      %534 = vmatprep.subr.mxu0 0.0
      %535 = vmatpush1.msra.mxu0 0.0
      %536 = vmatprep.subr.mxu0 0.0
      %537 = vmatpush1.msra.mxu0 0.0
      %538 = vmatprep.subr.mxu0 0.0
      %539 = vmatpush1.msra.mxu0 0.0
      %540 = vmatprep.subr.mxu0 0.0
      %541 = vmatpush1.msra.mxu0 0.0
      %542 = vmatprep.subr.mxu0 0.0
      %543 = vmatpush1.msra.mxu0 0.0
      %544 = vmatprep.subr.mxu0 0.0
      %545 = vmatpush1.msra.mxu0 0.0
      %546 = vmatprep.subr.mxu0 0.0
      %547 = vmatpush1.msra.mxu0 0.0
      %548 = vmatprep.subr.mxu0 0.0
      %549 = vmatpush1.msra.mxu0 0.0
      %550 = vmatprep.subr.mxu0 0.0
      %551 = vmatpush1.msra.mxu0 0.0
      %552 = vmatprep.subr.mxu0 0.0
      %553 = vmatpush1.msra.mxu0 0.0
      %554 = vmatprep.subr.mxu0 0.0
      %555 = vmatpush1.msra.mxu0 0.0
      %556 = vmatprep.subr.mxu0 0.0
      %557 = vmatpush1.msra.mxu0 0.0
      %558 = vmatprep.subr.mxu0 0.0
      %559 = vmatpush1.msra.mxu0 0.0
      %560 = vmatprep.subr.mxu0 0.0
      %561 = vmatpush1.msra.mxu0 0.0
      %562 = vmatprep.mubr.f32.mxu0 0.0
      %563 = vmatmul.mubr.f32.gmra.mrb[0].mxu0 %v425
      %v564 = vpop.f32.mrb[0].mxu0
      %v565 = vadd.f32 0.0, %v564
      %v566 = vpop.f32.mrb[0].mxu0
      %567 = vdwg.mxu0
      %v569 = vlaneseq
      %v570 = vshrl.u32 %v569, 7
      %v571 = vsub.s32 0, %v570
      %v572 = vrot.slane %v201, %v571
      %v573 = vlaneseq
      %v574 = vshrl.u32 %v573, 7
      %v575 = vsub.s32 1, %v574
      %v576 = vrot.slane %v201, %v575
      %v577 = vlaneseq
      %v578 = vshrl.u32 %v577, 7
      %v579 = vsub.s32 2, %v578
      %v580 = vrot.slane %v201, %v579
      %v584 = vmul.f32 %v494, %v572
      %v585 = vmul.f32 %v496, %v576
      %v586 = vmul.f32 %v565, %v580
      %v587 = vadd.f32 %v584, %v585
      %v588 = vadd.f32 %v587, %v586
      %589 = vadd.xlane.f32.xlu0 %v588
      %v590 = vpop.xlane.xlu0 %589
      %v591 = vmul.f32 %v584, %v494
      %v592 = vmul.f32 %v585, %v496
      %v593 = vmul.f32 %v586, %v565
      %v594 = vadd.f32 %v591, %v592
      %v595 = vadd.f32 %v594, %v593
      %596 = vadd.xlane.f32.xlu0 %v595
      %v597 = vpop.xlane.xlu0 %596
      %v598 = vmul.f32 %v590, %v590
      %v599 = vsub.f32 %v597, %v598
      %v600 = vsub.f32 %v494, %v590
      %v601 = vsub.f32 %v496, %v590
      %v602 = vsub.f32 %v565, %v590
      %v603 = vadd.f32 %v599, 1e-05
      %v604 = vrsqrt.pop %v603
      %v605 = vmul.f32 %v600, %v604
      %v606 = vmul.f32 %v601, %v604
      %v607 = vmul.f32 %v602, %v604
      %v608 = vmax.f32 %v605, 0.0
      %v609 = vmax.f32 %v606, 0.0
      %v610 = vmax.f32 %v607, 0.0
      %v612 = vlaneseq
      %v613 = vshrl.u32 %v612, 7
      %v614 = vsub.s32 0, %v613
      %v615 = vrot.slane %v203, %v614
      %v616 = vlaneseq
      %v617 = vshrl.u32 %v616, 7
      %v618 = vsub.s32 1, %v617
      %v619 = vrot.slane %v203, %v618
      %v620 = vlaneseq
      %v621 = vshrl.u32 %v620, 7
      %v622 = vsub.s32 2, %v621
      %v623 = vrot.slane %v203, %v622
      %v627 = vmul.f32 %v608, %v615
      %v628 = vmul.f32 %v609, %v619
      %v629 = vmul.f32 %v610, %v623
      %630 = vrot.lane.b32.xlu0 %v627, 92
      %v631 = vpop.permute.xlu0 %630
      %632 = vrot.lane.b32.xlu0 %v628, 92
      %v633 = vpop.permute.xlu0 %632
      %634 = vrot.lane.b32.xlu0 %v629, 92
      %v635 = vpop.permute.xlu0 %634
      %v636 = vsel %vm220, %v633, %v635
      %v637 = vsel %vm220, %v631, %v633
      %v638 = vsel %vm220, %v635, %v631
      %v639 = vmul.f32 %v228, %v637
      %v640 = vmul.f32 %v232, %v636
      %v641 = vmul.f32 %v236, %v638
      %v642 = vadd.f32 %v627, %v639
      %v643 = vadd.f32 %v628, %v640
      %v644 = vadd.f32 %v629, %v641
      %645 = vrot.lane.b32.xlu0 %v627, 36
      %v646 = vpop.permute.xlu0 %645
      %647 = vrot.lane.b32.xlu0 %v628, 36
      %v648 = vpop.permute.xlu0 %647
      %649 = vrot.lane.b32.xlu0 %v629, 36
      %v650 = vpop.permute.xlu0 %649
      %v651 = vsel %vm252, %v648, %v650
      %v652 = vsel %vm252, %v646, %v648
      %v653 = vsel %vm252, %v650, %v646
      %v654 = vmul.f32 %v260, %v653
      %v655 = vmul.f32 %v264, %v652
      %v656 = vmul.f32 %v268, %v651
      %v657 = vadd.f32 %v642, %v654
      %v658 = vadd.f32 %v643, %v655
      %v659 = vadd.f32 %v644, %v656
      %660 = vrot.lane.b32.xlu0 %v657, 126
      %v661 = vpop.permute.xlu0 %660
      %662 = vrot.lane.b32.xlu0 %v658, 126
      %v663 = vpop.permute.xlu0 %662
      %664 = vrot.lane.b32.xlu0 %v659, 126
      %v665 = vpop.permute.xlu0 %664
      %v666 = vsel %vm284, %v663, %v665
      %v667 = vsel %vm284, %v661, %v663
      %v668 = vsel %vm284, %v665, %v661
      %v669 = vmul.f32 %v292, %v667
      %v670 = vmul.f32 %v296, %v666
      %v671 = vmul.f32 %v300, %v668
      %v672 = vadd.f32 %v657, %v669
      %v673 = vadd.f32 %v658, %v670
      %v674 = vadd.f32 %v659, %v671
      %675 = vrot.lane.b32.xlu0 %v657, 2
      %v676 = vpop.permute.xlu0 %675
      %677 = vrot.lane.b32.xlu0 %v658, 2
      %v678 = vpop.permute.xlu0 %677
      %679 = vrot.lane.b32.xlu0 %v659, 2
      %v680 = vpop.permute.xlu0 %679
      %v681 = vsel %vm316, %v678, %v680
      %v682 = vsel %vm316, %v676, %v678
      %v683 = vsel %vm316, %v680, %v676
      %v684 = vmul.f32 %v324, %v683
      %v685 = vmul.f32 %v328, %v682
      %v686 = vmul.f32 %v332, %v681
      %v687 = vadd.f32 %v672, %v684
      %v688 = vadd.f32 %v673, %v685
      %v689 = vadd.f32 %v674, %v686
      %690 = vrot.lane.b32.xlu0 %v687, 19
      %v691 = vpop.permute.xlu0 %690
      %692 = vrot.lane.b32.xlu0 %v688, 19
      %v693 = vpop.permute.xlu0 %692
      %694 = vrot.lane.b32.xlu0 %v689, 19
      %v695 = vpop.permute.xlu0 %694
      %v696 = vsel %vm348, %v693, %v695
      %v697 = vsel %vm348, %v691, %v693
      %v698 = vsel %vm348, %v695, %v691
      %699 = vrot.lane.b32.xlu0 %v687, 18
      %v700 = vpop.permute.xlu0 %699
      %701 = vrot.lane.b32.xlu0 %v688, 18
      %v702 = vpop.permute.xlu0 %701
      %703 = vrot.lane.b32.xlu0 %v689, 18
      %v704 = vpop.permute.xlu0 %703
      %v705 = vsel %vm358, %v702, %v704
      %v706 = vsel %vm358, %v700, %v702
      %v707 = vsel %vm358, %v704, %v700
      %708 = vrot.lane.b32.xlu0 %v687, 17
      %v709 = vpop.permute.xlu0 %708
      %710 = vrot.lane.b32.xlu0 %v688, 17
      %v711 = vpop.permute.xlu0 %710
      %712 = vrot.lane.b32.xlu0 %v689, 17
      %v713 = vpop.permute.xlu0 %712
      %v714 = vsel %vm368, %v711, %v713
      %v715 = vsel %vm368, %v709, %v711
      %v716 = vsel %vm368, %v713, %v709
      %717 = vrot.lane.b32.xlu0 %v687, 1
      %v718 = vpop.permute.xlu0 %717
      %719 = vrot.lane.b32.xlu0 %v688, 1
      %v720 = vpop.permute.xlu0 %719
      %721 = vrot.lane.b32.xlu0 %v689, 1
      %v722 = vpop.permute.xlu0 %721
      %v723 = vsel %vm378, %v720, %v722
      %v724 = vsel %vm378, %v718, %v720
      %v725 = vsel %vm378, %v722, %v718
      %726 = vrot.lane.b32.xlu0 %v687, 127
      %v727 = vpop.permute.xlu0 %726
      %728 = vrot.lane.b32.xlu0 %v688, 127
      %v729 = vpop.permute.xlu0 %728
      %730 = vrot.lane.b32.xlu0 %v689, 127
      %v731 = vpop.permute.xlu0 %730
      %v732 = vsel %vm388, %v729, %v731
      %v733 = vsel %vm388, %v727, %v729
      %v734 = vsel %vm388, %v731, %v727
      %735 = vrot.lane.b32.xlu0 %v687, 111
      %v736 = vpop.permute.xlu0 %735
      %737 = vrot.lane.b32.xlu0 %v688, 111
      %v738 = vpop.permute.xlu0 %737
      %739 = vrot.lane.b32.xlu0 %v689, 111
      %v740 = vpop.permute.xlu0 %739
      %v741 = vsel %vm398, %v738, %v740
      %v742 = vsel %vm398, %v736, %v738
      %v743 = vsel %vm398, %v740, %v736
      %744 = vrot.lane.b32.xlu0 %v687, 110
      %v745 = vpop.permute.xlu0 %744
      %746 = vrot.lane.b32.xlu0 %v688, 110
      %v747 = vpop.permute.xlu0 %746
      %748 = vrot.lane.b32.xlu0 %v689, 110
      %v749 = vpop.permute.xlu0 %748
      %v750 = vsel %vm408, %v747, %v749
      %v751 = vsel %vm408, %v745, %v747
      %v752 = vsel %vm408, %v749, %v745
      %753 = vrot.lane.b32.xlu0 %v687, 109
      %v754 = vpop.permute.xlu0 %753
      %755 = vrot.lane.b32.xlu0 %v688, 109
      %v756 = vpop.permute.xlu0 %755
      %757 = vrot.lane.b32.xlu0 %v689, 109
      %v758 = vpop.permute.xlu0 %757
      %v759 = vsel %vm418, %v756, %v758
      %v760 = vsel %vm418, %v754, %v756
      %v761 = vsel %vm418, %v758, %v754
      %v762 = vld [vmem:[%s2] sm:$0xff]
      %v764 = vsel %vm423, %v762, 0
      %766 = vmatprep.subr.mxu0 %v697
      %767 = vmatpush1.msra.mxu0 %v698
      %768 = vmatprep.subr.mxu0 %v706
      %769 = vmatpush1.msra.mxu0 %v707
      %770 = vmatprep.subr.mxu0 %v715
      %771 = vmatpush1.msra.mxu0 %v716
      %772 = vmatprep.subr.mxu0 %v724
      %773 = vmatpush1.msra.mxu0 %v725
      %774 = vmatprep.subr.mxu0 %v688
      %775 = vmatpush1.msra.mxu0 %v687
      %776 = vmatprep.subr.mxu0 %v732
      %777 = vmatpush1.msra.mxu0 %v733
      %778 = vmatprep.subr.mxu0 %v741
      %779 = vmatpush1.msra.mxu0 %v742
      %780 = vmatprep.subr.mxu0 %v750
      %781 = vmatpush1.msra.mxu0 %v751
      %782 = vmatprep.subr.mxu0 %v759
      %783 = vmatpush1.msra.mxu0 %v760
      %784 = vmatprep.subr.mxu0 0.0
      %785 = vmatpush1.msra.mxu0 0.0
      %786 = vmatprep.subr.mxu0 0.0
      %787 = vmatpush1.msra.mxu0 0.0
      %788 = vmatprep.subr.mxu0 0.0
      %789 = vmatpush1.msra.mxu0 0.0
      %790 = vmatprep.subr.mxu0 0.0
      %791 = vmatpush1.msra.mxu0 0.0
      %792 = vmatprep.subr.mxu0 0.0
      %793 = vmatpush1.msra.mxu0 0.0
      %794 = vmatprep.subr.mxu0 0.0
      %795 = vmatpush1.msra.mxu0 0.0
      %796 = vmatprep.subr.mxu0 0.0
      %797 = vmatpush1.msra.mxu0 0.0
      %798 = vmatprep.subr.mxu0 0.0
      %799 = vmatpush1.msra.mxu0 0.0
      %800 = vmatprep.subr.mxu0 0.0
      %801 = vmatpush1.msra.mxu0 0.0
      %802 = vmatprep.subr.mxu0 0.0
      %803 = vmatpush1.msra.mxu0 0.0
      %804 = vmatprep.subr.mxu0 0.0
      %805 = vmatpush1.msra.mxu0 0.0
      %806 = vmatprep.subr.mxu0 0.0
      %807 = vmatpush1.msra.mxu0 0.0
      %808 = vmatprep.subr.mxu0 0.0
      %809 = vmatpush1.msra.mxu0 0.0
      %810 = vmatprep.subr.mxu0 0.0
      %811 = vmatpush1.msra.mxu0 0.0
      %812 = vmatprep.subr.mxu0 0.0
      %813 = vmatpush1.msra.mxu0 0.0
      %814 = vmatprep.subr.mxu0 0.0
      %815 = vmatpush1.msra.mxu0 0.0
      %816 = vmatprep.subr.mxu0 0.0
      %817 = vmatpush1.msra.mxu0 0.0
      %818 = vmatprep.subr.mxu0 0.0
      %819 = vmatpush1.msra.mxu0 0.0
      %820 = vmatprep.subr.mxu0 0.0
      %821 = vmatpush1.msra.mxu0 0.0
      %822 = vmatprep.subr.mxu0 0.0
      %823 = vmatpush1.msra.mxu0 0.0
      %824 = vmatprep.subr.mxu0 0.0
      %825 = vmatpush1.msra.mxu0 0.0
      %826 = vmatprep.subr.mxu0 0.0
      %827 = vmatpush1.msra.mxu0 0.0
      %828 = vmatprep.subr.mxu0 0.0
      %829 = vmatpush1.msra.mxu0 0.0
      %830 = vmatprep.mubr.f32.mxu0 0.0
      %831 = vmatmul.mubr.f32.gmra.mrb[0].mxu0 %v764
      %v832 = vpop.f32.mrb[0].mxu0
      %v833 = vadd.f32 0.0, %v832
      %v834 = vpop.f32.mrb[0].mxu0
      %v835 = vadd.f32 0.0, %v834
      %836 = vdwg.mxu0
      %837 = vmatprep.subr.mxu0 0.0
      %838 = vmatpush1.msra.mxu0 %v696
      %839 = vmatprep.subr.mxu0 0.0
      %840 = vmatpush1.msra.mxu0 %v705
      %841 = vmatprep.subr.mxu0 0.0
      %842 = vmatpush1.msra.mxu0 %v714
      %843 = vmatprep.subr.mxu0 0.0
      %844 = vmatpush1.msra.mxu0 %v723
      %845 = vmatprep.subr.mxu0 0.0
      %846 = vmatpush1.msra.mxu0 %v689
      %847 = vmatprep.subr.mxu0 0.0
      %848 = vmatpush1.msra.mxu0 %v734
      %849 = vmatprep.subr.mxu0 0.0
      %850 = vmatpush1.msra.mxu0 %v743
      %851 = vmatprep.subr.mxu0 0.0
      %852 = vmatpush1.msra.mxu0 %v752
      %853 = vmatprep.subr.mxu0 0.0
      %854 = vmatpush1.msra.mxu0 %v761
      %855 = vmatprep.subr.mxu0 0.0
      %856 = vmatpush1.msra.mxu0 0.0
      %857 = vmatprep.subr.mxu0 0.0
      %858 = vmatpush1.msra.mxu0 0.0
      %859 = vmatprep.subr.mxu0 0.0
      %860 = vmatpush1.msra.mxu0 0.0
      %861 = vmatprep.subr.mxu0 0.0
      %862 = vmatpush1.msra.mxu0 0.0
      %863 = vmatprep.subr.mxu0 0.0
      %864 = vmatpush1.msra.mxu0 0.0
      %865 = vmatprep.subr.mxu0 0.0
      %866 = vmatpush1.msra.mxu0 0.0
      %867 = vmatprep.subr.mxu0 0.0
      %868 = vmatpush1.msra.mxu0 0.0
      %869 = vmatprep.subr.mxu0 0.0
      %870 = vmatpush1.msra.mxu0 0.0
      %871 = vmatprep.subr.mxu0 0.0
      %872 = vmatpush1.msra.mxu0 0.0
      %873 = vmatprep.subr.mxu0 0.0
      %874 = vmatpush1.msra.mxu0 0.0
      %875 = vmatprep.subr.mxu0 0.0
      %876 = vmatpush1.msra.mxu0 0.0
      %877 = vmatprep.subr.mxu0 0.0
      %878 = vmatpush1.msra.mxu0 0.0
      %879 = vmatprep.subr.mxu0 0.0
      %880 = vmatpush1.msra.mxu0 0.0
      %881 = vmatprep.subr.mxu0 0.0
      %882 = vmatpush1.msra.mxu0 0.0
      %883 = vmatprep.subr.mxu0 0.0
      %884 = vmatpush1.msra.mxu0 0.0
      %885 = vmatprep.subr.mxu0 0.0
      %886 = vmatpush1.msra.mxu0 0.0
      %887 = vmatprep.subr.mxu0 0.0
      %888 = vmatpush1.msra.mxu0 0.0
      %889 = vmatprep.subr.mxu0 0.0
      %890 = vmatpush1.msra.mxu0 0.0
      %891 = vmatprep.subr.mxu0 0.0
      %892 = vmatpush1.msra.mxu0 0.0
      %893 = vmatprep.subr.mxu0 0.0
      %894 = vmatpush1.msra.mxu0 0.0
      %895 = vmatprep.subr.mxu0 0.0
      %896 = vmatpush1.msra.mxu0 0.0
      %897 = vmatprep.subr.mxu0 0.0
      %898 = vmatpush1.msra.mxu0 0.0
      %899 = vmatprep.subr.mxu0 0.0
      %900 = vmatpush1.msra.mxu0 0.0
      %901 = vmatprep.mubr.f32.mxu0 0.0
      %902 = vmatmul.mubr.f32.gmra.mrb[0].mxu0 %v764
      %v903 = vpop.f32.mrb[0].mxu0
      %v904 = vadd.f32 0.0, %v903
      %v905 = vpop.f32.mrb[0].mxu0
      %906 = vdwg.mxu0
      %v907 = vmul.f32 %v833, %v572
      %v908 = vmul.f32 %v835, %v576
      %v909 = vmul.f32 %v904, %v580
      %v910 = vadd.f32 %v907, %v908
      %v911 = vadd.f32 %v910, %v909
      %912 = vadd.xlane.f32.xlu0 %v911
      %v913 = vpop.xlane.xlu0 %912
      %v914 = vmul.f32 %v907, %v833
      %v915 = vmul.f32 %v908, %v835
      %v916 = vmul.f32 %v909, %v904
      %v917 = vadd.f32 %v914, %v915
      %v918 = vadd.f32 %v917, %v916
      %919 = vadd.xlane.f32.xlu0 %v918
      %v920 = vpop.xlane.xlu0 %919
      %v921 = vmul.f32 %v913, %v913
      %v922 = vsub.f32 %v920, %v921
      %v923 = vsub.f32 %v833, %v913
      %v924 = vsub.f32 %v835, %v913
      %v925 = vsub.f32 %v904, %v913
      %v926 = vadd.f32 %v922, 1e-05
      %v927 = vrsqrt.pop %v926
      %v928 = vmul.f32 %v923, %v927
      %v929 = vmul.f32 %v924, %v927
      %v930 = vmul.f32 %v925, %v927
      %v931 = vadd.f32 %v198, %v928
      %v932 = vadd.f32 %v199, %v929
      %v933 = vadd.f32 %v200, %v930
      %v936 = vcombine.low %v931, %v932
      %938 = vst [vmem:[%s197] sm:$0xff] %v936
      %939 = vst [vmem:[%s197 + $0x8] sm:$0xf] %v933
      %p940 = scmp.lt.s32.totalorder %s15, 1
      %s941 = scalar_select %p940, %s15, 1
      %s942 = smul.addr %s941, 3
      %s943 = smul.addr %s942, 4
      %s944 = scalar_lea.vmem %s4, %s943
      // Predicated region
      $region37: #{residual_block.1} parent=35 // pred_check
        %p945 = pneg %p122
      $region38: #{residual_block.1} parent=35 // pred_check_branch
        %947 = sbr.rel (%p945) target = $region40
      $region39: #{residual_block.1} parent=35 // pred_region
        _
      $region40: #{residual_block.1} parent=35 // pred_fallthru
        _
    $region36: #{residual_block.1} parent=5 // pred_fallthru
      _
    %p948 = scmp.le.s32.totalorder 2, %s10
    // Predicated region
    $region41: #{residual_block.1} parent=5 // pred_check
      %p949 = pneg %p948
    $region42: #{residual_block.1} parent=5 // pred_check_branch
      %951 = sbr.rel (%p949) target = $region44
    $region43: #{residual_block.1} parent=5 // pred_region
      %s952 = ssub.s32 %s10, 2
      // Predicated region
      $region45: #{residual_block.1} parent=43 // pred_check
        %p953 = pneg %p128
      $region46: #{residual_block.1} parent=43 // pred_check_branch
        %955 = sbr.rel (%p953) target = $region48
      $region47: #{residual_block.1} parent=43 // pred_region
        %p956 = scmp.lt.s32.totalorder %s16, 1
        %s957 = scalar_select %p956, %s16, 1
        %s958 = smul.addr %s957, 3
        %s959 = smul.addr %s958, 4
        %s960 = scalar_lea.vmem %s4, %s959
      $region48: #{residual_block.1} parent=43 // pred_fallthru
        _
    $region44: #{residual_block.1} parent=5 // pred_fallthru
      _
  $region6: #{residual_block.1} parent=0 // loop_footer
    %s14 = sadd.s32 1, %s10
  $region7: #{residual_block.1} parent=0 // loop_footer_branch
    %9 = sbr.rel target = $region3
  $region8: #{residual_block.1} parent=0 // loop_exit
    _

</llo_original>
